<compile_context>
chip_gen: v5e
topology: v5e:2x2
jax: 0.10.0
libtpu: 0.0.40
codegen_flags: <defaults>
</compile_context>

<pallas_src>
import functools
import math

import jax
import jax.numpy as jnp
from jax import lax
from jax.experimental import pallas as pl
from jax.experimental.pallas import tpu as pltpu


def _round_up(v, m):
    return ((v + m - 1) // m) * m


def _vmem_capacity_bytes():
    """Per-generation VMEM capacity (v5e/v6e: 128 MiB, v7x: 64 MiB per TC)."""
    try:
        cap = getattr(pltpu.get_tpu_info(), "vmem_capacity_bytes", None)
        if cap:
            return int(cap)
    except Exception:
        pass
    return 64 << 20  # conservative fallback (v7x per-TC VMEM)


def _gelu(x, approximate):
    if approximate:
        # tanh GELU -> EUP slot (useful when VPU-bound at small H); opt-in numerics.
        c = math.sqrt(2.0 / math.pi)
        return 0.5 * x * (1.0 + jnp.tanh(c * (x + 0.044715 * x * x * x)))
    # PyTorch nn.GELU() default = exact erf GELU.
    return 0.5 * x * (1.0 + lax.erf(x * (1.0 / math.sqrt(2.0))))


def _layer_norm(x, ln_w, ln_b, eps, inv_h):
    """f32 LayerNorm over the true hidden dim (padded lanes are zero; ln_w/ln_b
    padded with zeros so padded lanes come out exactly zero)."""
    s1 = jnp.sum(x, axis=-1, keepdims=True)
    s2 = jnp.sum(x * x, axis=-1, keepdims=True)
    mean = s1 * inv_h
    # Clamp single-pass variance against f32 cancellation when |mean| >> std.
    var = jnp.maximum(s2 * inv_h - mean * mean, 0.0)
    return (x - mean) * lax.rsqrt(var + eps) * ln_w + ln_b


# ---------------------------------------------------------------------------
# Kernels
# ---------------------------------------------------------------------------

def _ffn_kernel_resident(x_ref, vec_ref, wgp_ref, w2_ref, o_ref, *,
                         eps, inv_h, hp, ip, approximate_gelu):
    """Weights fully resident in VMEM; one fused gate|proj matmul per row tile."""
    x = x_ref[...].astype(jnp.float32)                         # (TM, Hp) residual
    xn = _layer_norm(x, vec_ref[1:2, :hp], vec_ref[2:3, :hp], eps, inv_h)

    # Fused gate|proj matmul: single MXU pass over the (Hp, 2*Ip) weight.
    gp = jnp.dot(xn.astype(jnp.bfloat16), wgp_ref[...],
                 preferred_element_type=jnp.float32) + vec_ref[0:1, :]
    inter = _gelu(gp[:, :ip], approximate_gelu) * gp[:, ip:]    # 128-aligned slice
    # TODO(synk): activation_dropout / dropout omitted (identity in eval mode).

    out = jnp.dot(inter.astype(jnp.bfloat16), w2_ref[...],
                  preferred_element_type=jnp.float32)
    o_ref[...] = (out + vec_ref[3:4, :hp] + x).astype(o_ref.dtype)


def _ffn_kernel_tiled(x_ref, vec_ref, bg_ref, b1_ref, wg_ref, w1_ref, w2_ref,
                      o_ref, xn_ref, acc_ref, *, eps, inv_h, hp,
                      approximate_gelu):
    """Intermediate-dim tiled path: grid = (row tiles, intermediate tiles).

    LayerNorm is computed once per row tile (cached in xn_ref); partial
    inter @ W2 products accumulate into acc_ref; output written at the last
    intermediate step.
    """
    j = pl.program_id(1)

    @pl.when(j == 0)
    def _():
        x = x_ref[...].astype(jnp.float32)
        xn_ref[...] = _layer_norm(x, vec_ref[1:2, :hp], vec_ref[2:3, :hp],
                                  eps, inv_h)
        acc_ref[...] = jnp.zeros_like(acc_ref)

    xn_b = xn_ref[...].astype(jnp.bfloat16)
    gate = jnp.dot(xn_b, wg_ref[...],
                   preferred_element_type=jnp.float32) + bg_ref[0:1, :]
    proj = jnp.dot(xn_b, w1_ref[...],
                   preferred_element_type=jnp.float32) + b1_ref[0:1, :]
    inter = _gelu(gate, approximate_gelu) * proj
    # TODO(synk): activation_dropout / dropout omitted (identity in eval mode).
    acc_ref[...] += jnp.dot(inter.astype(jnp.bfloat16), w2_ref[...],
                            preferred_element_type=jnp.float32)

    @pl.when(j == pl.num_programs(1) - 1)
    def _():
        o_ref[...] = (acc_ref[...] + vec_ref[3:4, :hp]
                      + x_ref[...].astype(jnp.float32)).astype(o_ref.dtype)


# ---------------------------------------------------------------------------
# Parameter preparation (one-time: hoist out of the per-call wrapper)
# ---------------------------------------------------------------------------

def prepare_params(params):
    """Pad / bf16-cast / fuse the FFN parameters once (call at model init).

    Raw weights are stored (in, out): wg (H, H), w1 (H, I), w2 (I, H).
    Returns a dict with:
      w_gp : (Hp, 2*Ip) bf16  — [Wg | W1] fused along the output dim
      w2   : (Ip, Hp)   bf16
      vec  : (8, 2*Ip)  f32   — row 0: [bg | b1], row 1: ln_w, row 2: ln_b, row 3: b2
    """
    wg = jnp.asarray(params["wg"], jnp.float32)
    w1 = jnp.asarray(params["w1"], jnp.float32)
    w2 = jnp.asarray(params["w2"], jnp.float32)
    H = wg.shape[0]
    I = w1.shape[1]
    if wg.shape != (H, H) or w1.shape != (H, I) or w2.shape != (I, H):
        raise ValueError("weights must be wg:(H,H), w1:(H,I), w2:(I,H) (in,out)")
    if I != H:
        raise ValueError(
            "gated FFN requires intermediate_size == hidden_dim "
            f"(got H={H}, I={I}) — the PyTorch module has the same constraint")

    Hp = _round_up(H, 128)
    Ip = _round_up(I, 128)

    def pad2(a, r, c):
        return jnp.pad(a, ((0, r - a.shape[0]), (0, c - a.shape[1])))

    w_gp = jnp.concatenate([pad2(wg, Hp, Ip), pad2(w1, Hp, Ip)],
                           axis=1).astype(jnp.bfloat16)
    w2p = pad2(w2, Ip, Hp).astype(jnp.bfloat16)

    def row(v, width):
        v = jnp.asarray(v, jnp.float32).reshape(-1)
        return jnp.pad(v, (0, width - v.shape[0]))

    vec = jnp.zeros((8, 2 * Ip), jnp.float32)
    vec = vec.at[0, :Ip].set(row(params["bg"], Ip))
    vec = vec.at[0, Ip:].set(row(params["b1"], Ip))
    vec = vec.at[1, :Hp].set(row(params["ln_w"], Hp))
    vec = vec.at[2, :Hp].set(row(params["ln_b"], Hp))
    vec = vec.at[3, :Hp].set(row(params["b2"], Hp))

    return dict(w_gp=w_gp, w2=w2p, vec=vec, hidden_dim=H, intermediate_size=I,
                hp=Hp, ip=Ip, _prepared=True)


# ---------------------------------------------------------------------------
# Wrapper
# ---------------------------------------------------------------------------

def positionwise_ffn(x, params, *, eps=1e-5, block_rows=None, block_inter=None,
                     approximate_gelu=False):
    """Gated PositionwiseFFN forward. x: (..., hidden_dim), returns same shape.

    `params` is either the raw dict from init_params() (prepared on the fly —
    hoist prepare_params() out of hot loops in real use) or the output of
    prepare_params().
    """
    if not params.get("_prepared", False):
        params = prepare_params(params)

    H = params["hidden_dim"]
    Hp, Ip = params["hp"], params["ip"]
    w_gp, w2, vec = params["w_gp"], params["w2"], params["vec"]

    orig_shape = x.shape
    if orig_shape[-1] != H:
        raise ValueError(f"last dim of x must be {H}, got {orig_shape[-1]}")
    x2 = x.reshape(-1, H)
    N = x2.shape[0]

    # --- row tiling: balanced tile count, (8,128)-aligned, minimal padding ---
    if block_rows is None:
        block_rows = 512            # sweep 256 on v5e (4x128^2 MXU, lower HBM BW)
    block_rows = max(8, _round_up(block_rows, 8))
    n_row = max(1, -(-N // block_rows))
    block_rows = _round_up(-(-N // n_row), 8)

    cap = _vmem_capacity_bytes()
    budget = int(0.85 * cap)        # headroom for compiler scratch / DMA descriptors
    itemsize = jnp.dtype(x.dtype).itemsize

    def resident_bytes(tm, single):
        w = (1 if single else 2) * 2 * 3 * Hp * Ip           # bf16 [Wg|W1] + W2
        v = (1 if single else 2) * 4 * 8 * 2 * Ip            # packed vectors
        io = 2 * 2 * tm * Hp * itemsize                      # x + out, double-buffered
        live = 4 * tm * 4 * (Hp + Ip)                        # f32/bf16 intermediates
        return int(1.25 * (w + v + io + live))

    def tiled_bytes(tm, tj_, single):
        w = 2 * 2 * 3 * Hp * tj_                             # per-step weight tiles (dbl-buf)
        v = (1 if single else 2) * 4 * 8 * 2 * Ip + 2 * 2 * 4 * 8 * tj_
        io = 2 * 2 * tm * Hp * itemsize
        scratch = tm * Hp * (4 + 4)                          # cached xn f32 + acc f32
        live = 4 * tm * (4 * tj_ + 2 * Hp)
        return int(1.25 * (w + v + io + scratch + live))

    # --- choose resident (fused single-matmul) vs. intermediate-tiled path ---
    use_tiled = block_inter is not None
    if not use_tiled:
        while resident_bytes(block_rows, True) > budget and block_rows > 128:
            block_rows = max(128, _round_up(block_rows // 2, 8))
        use_tiled = resident_bytes(block_rows, True) > budget

    if use_tiled:
        tj = Ip if block_inter is None else min(_round_up(block_inter, 128), Ip)
        while Ip % tj:
            tj -= 128
        while tiled_bytes(block_rows, tj, True) > budget and tj > 128:
            tj -= 128
            while Ip % tj:
                tj -= 128
        while tiled_bytes(block_rows, tj, True) > budget and block_rows > 64:
            block_rows = max(64, _round_up(block_rows // 2, 8))
        n_inter = Ip // tj

    # Re-balance rows after any shrinking (never increases block_rows).
    n_row = max(1, -(-N // block_rows))
    block_rows = _round_up(-(-N // n_row), 8)
    Np = n_row * block_rows

    # Pad activations only when actually needed (avoids extra HBM copies when
    # H % 128 == 0 and N already tiles evenly).
    x_p = x2 if (Np == N and Hp == H) else jnp.pad(x2, ((0, Np - N), (0, Hp - H)))

    def _run(single_buffer_consts):
        def _const(shape):
            idx = lambda *_: (0,) * len(shape)
            if single_buffer_consts:
                # Constant-index blocks: a second pipeline buffer is pure VMEM waste.
                return pl.BlockSpec(shape, idx, pipeline_mode=pl.Buffered(1))
            return pl.BlockSpec(shape, idx)

        if not use_tiled:
            kernel = functools.partial(
                _ffn_kernel_resident, eps=eps, inv_h=1.0 / H, hp=Hp, ip=Ip,
                approximate_gelu=approximate_gelu)
            grid = (n_row,)
            in_specs = [
                pl.BlockSpec((block_rows, Hp), lambda i: (i, 0)),   # x row tile
                _const((8, 2 * Ip)),                                # packed ln/bias
                _const((Hp, 2 * Ip)),                               # fused [Wg|W1] bf16
                _const((Ip, Hp)),                                   # W2 bf16
            ]
            out_spec = pl.BlockSpec((block_rows, Hp), lambda i: (i, 0))
            scratch = []
            dims = ("parallel",)
            args = (x_p, vec, w_gp, w2)
            vmem_limit = resident_bytes(block_rows, single_buffer_consts)
        else:
            kernel = functools.partial(
                _ffn_kernel_tiled, eps=eps, inv_h=1.0 / H, hp=Hp,
                approximate_gelu=approximate_gelu)
            grid = (n_row, n_inter)
            in_specs = [
                pl.BlockSpec((block_rows, Hp), lambda i, j: (i, 0)),    # x (resident over j)
                _const((8, 2 * Ip)),                                    # packed ln/b2
                pl.BlockSpec((8, tj), lambda i, j: (0, j)),             # gate bias tile
                pl.BlockSpec((8, tj), lambda i, j: (0, n_inter + j)),   # proj bias tile
                pl.BlockSpec((Hp, tj), lambda i, j: (0, j)),            # Wg column tile
                pl.BlockSpec((Hp, tj), lambda i, j: (0, n_inter + j)),  # W1 column tile
                pl.BlockSpec((tj, Hp), lambda i, j: (j, 0)),            # W2 row tile
            ]
            out_spec = pl.BlockSpec((block_rows, Hp), lambda i, j: (i, 0))
            scratch = [pltpu.VMEM((block_rows, Hp), jnp.float32),       # cached LayerNorm
                       pltpu.VMEM((block_rows, Hp), jnp.float32)]       # f32 accumulator
            dims = ("parallel", "arbitrary")
            args = (x_p, vec, vec, vec, w_gp, w_gp, w2)
            vmem_limit = tiled_bytes(block_rows, tj, single_buffer_consts)

        vmem_limit = max(min(int(vmem_limit), budget), min(budget, 16 << 20))
        return pl.pallas_call(
            kernel,
            out_shape=jax.ShapeDtypeStruct((Np, Hp), x.dtype),
            grid_spec=pltpu.PrefetchScalarGridSpec(
                num_scalar_prefetch=0,
                grid=grid,
                in_specs=in_specs,
                out_specs=out_spec,
                scratch_shapes=scratch),
            compiler_params=pltpu.CompilerParams(
                dimension_semantics=dims,
                vmem_limit_bytes=vmem_limit),
        )(*args)

    try:
        out = _run(True)
    except Exception:  # fallback for jax versions without pipeline_mode/Buffered(1)
        out = _run(False)

    if Np != N or Hp != H:
        out = out[:N, :H]
    return out.reshape(orig_shape)


# ---------------------------------------------------------------------------
# Reference init / forward (match the PyTorch module) and self-test
# ---------------------------------------------------------------------------

def init_params(key, hidden_dim, intermediate_size):
    """Matches PositionwiseFFN.init_weights: xavier_uniform weights, zero bias,
    LayerNorm weight=1 / bias=0. Weights stored pre-transposed as (in, out)."""
    kg, k1, k2 = jax.random.split(key, 3)

    def xavier_t(k, out_f, in_f):
        bound = math.sqrt(6.0 / (in_f + out_f))
        w = jax.random.uniform(k, (out_f, in_f), jnp.float32, -bound, bound)
        return w.T  # (in, out) so kernel does xn @ W

    return dict(
        wg=xavier_t(kg, hidden_dim, hidden_dim),
        bg=jnp.zeros((1, hidden_dim), jnp.float32),
        w1=xavier_t(k1, intermediate_size, hidden_dim),
        b1=jnp.zeros((1, intermediate_size), jnp.float32),
        w2=xavier_t(k2, hidden_dim, intermediate_size),
        b2=jnp.zeros((1, hidden_dim), jnp.float32),
        ln_w=jnp.ones((1, hidden_dim), jnp.float32),
        ln_b=jnp.zeros((1, hidden_dim), jnp.float32),
    )


def _ref_forward(x, p, eps=1e-5):
    mean = jnp.mean(x, axis=-1, keepdims=True)
    var = jnp.mean(jnp.square(x - mean), axis=-1, keepdims=True)
    xn = (x - mean) / jnp.sqrt(var + eps) * p["ln_w"][0] + p["ln_b"][0]
    gate = jax.nn.gelu(xn @ p["wg"] + p["bg"][0], approximate=False)
    out = gate * (xn @ p["w1"] + p["b1"][0])
    out = out @ p["w2"] + p["b2"][0]
    return out + x


if __name__ == "__main__":
    key = jax.random.PRNGKey(0)
    kx1, kp1, kx2, kp2 = jax.random.split(key, 4)

    # --- test 1: resident (fused) path, raw params auto-prepared ---
    batch, seq, hidden = 2, 8, 32
    x1 = jax.random.normal(kx1, (batch, seq, hidden), dtype=jnp.float32)
    params1 = init_params(kp1, hidden, hidden)
    ref1 = _ref_forward(x1, params1)

    out1 = jax.block_until_ready(positionwise_ffn(x1, params1))
    assert out1.shape == x1.shape
    # bf16 matmul operands, f32 accumulation -> relaxed tolerance vs f32 ref.
    assert jnp.allclose(out1, ref1, rtol=5e-2, atol=5e-2), "mismatch (resident)"

    # Multi-row-tile resident path (exercises the pipelined row grid).
    out1b = jax.block_until_ready(positionwise_ffn(x1, params1, block_rows=8))
    assert jnp.allclose(out1b, ref1, rtol=5e-2, atol=5e-2), "mismatch (row-tiled)"

    # --- test 2: prepared params + forced intermediate-tiled path (2x2 grid) ---
    hidden2 = 256
    x2 = jax.random.normal(kx2, (batch, seq, hidden2), dtype=jnp.float32)
    params2 = init_params(kp2, hidden2, hidden2)
    prepared2 = prepare_params(params2)   # one-time prep (hoisted out of the call)
    ref2 = _ref_forward(x2, params2)

    out2 = jax.block_until_ready(
        positionwise_ffn(x2, prepared2, block_rows=8, block_inter=128))
    assert out2.shape == x2.shape
    assert jnp.allclose(out2, ref2, rtol=1e-1, atol=1e-1), "mismatch (inter-tiled)"

    print("KERNEL_OK")
</pallas_src>

<mosaic_0001>
module attributes {stable_mosaic.version = 11 : i64} {
  func.func @_ffn_kernel_resident(%arg0: i32, %arg1: memref<16x128xf32, #tpu.memory_space<vmem>>, %arg2: memref<8x256xf32, #tpu.memory_space<vmem>>, %arg3: memref<128x256xbf16, #tpu.memory_space<vmem>>, %arg4: memref<128x128xbf16, #tpu.memory_space<vmem>>, %arg5: memref<16x128xf32, #tpu.memory_space<vmem>>) attributes {dimension_semantics = [#tpu.dimension_semantics<parallel>], iteration_bounds = array<i64: 1>, scalar_prefetch = 0 : i64, scratch_operands = 0 : i64, tpu.core_type = #tpu.core_type<tc>, window_params = [{transform_indices = @transform_0, window_bounds = array<i64: 16, 128>}, {pipeline_mode = #tpu.pipeline_mode<synchronous>, transform_indices = @transform_1, window_bounds = array<i64: 8, 256>}, {pipeline_mode = #tpu.pipeline_mode<synchronous>, transform_indices = @transform_2, window_bounds = array<i64: 128, 256>}, {pipeline_mode = #tpu.pipeline_mode<synchronous>, transform_indices = @transform_3, window_bounds = array<i64: 128, 128>}, {transform_indices = @transform_4, window_bounds = array<i64: 16, 128>}]} {
    %c0 = arith.constant 0 : index
    %c0_0 = arith.constant 0 : index
    %0 = vector.load %arg1[%c0, %c0_0] : memref<16x128xf32, #tpu.memory_space<vmem>>, vector<16x128xf32>
    %c1 = arith.constant 1 : index
    %c0_1 = arith.constant 0 : index
    %1 = vector.load %arg2[%c1, %c0_1] : memref<8x256xf32, #tpu.memory_space<vmem>>, vector<1x128xf32>
    %c2 = arith.constant 2 : index
    %c0_2 = arith.constant 0 : index
    %2 = vector.load %arg2[%c2, %c0_2] : memref<8x256xf32, #tpu.memory_space<vmem>>, vector<1x128xf32>
    %cst = arith.constant dense<0.000000e+00> : vector<16xf32>
    %3 = vector.multi_reduction <add>, %0, %cst [1] : vector<16x128xf32> to vector<16xf32>
    %4 = vector.shape_cast %3 : vector<16xf32> to vector<16x1xf32>
    %5 = arith.mulf %0, %0 : vector<16x128xf32>
    %cst_3 = arith.constant dense<0.000000e+00> : vector<16xf32>
    %6 = vector.multi_reduction <add>, %5, %cst_3 [1] : vector<16x128xf32> to vector<16xf32>
    %7 = vector.shape_cast %6 : vector<16xf32> to vector<16x1xf32>
    %cst_4 = arith.constant 3.125000e-02 : f32
    %8 = vector.broadcast %cst_4 : f32 to vector<16x1xf32>
    %9 = arith.mulf %4, %8 : vector<16x1xf32>
    %cst_5 = arith.constant 3.125000e-02 : f32
    %10 = vector.broadcast %cst_5 : f32 to vector<16x1xf32>
    %11 = arith.mulf %7, %10 : vector<16x1xf32>
    %12 = arith.mulf %9, %9 : vector<16x1xf32>
    %13 = arith.subf %11, %12 : vector<16x1xf32>
    %cst_6 = arith.constant 0.000000e+00 : f32
    %14 = vector.broadcast %cst_6 : f32 to vector<16x1xf32>
    %15 = arith.maximumf %13, %14 : vector<16x1xf32>
    %16 = vector.broadcast %9 : vector<16x1xf32> to vector<16x128xf32>
    %17 = arith.subf %0, %16 : vector<16x128xf32>
    %cst_7 = arith.constant 9.99999974E-6 : f32
    %18 = vector.broadcast %cst_7 : f32 to vector<16x1xf32>
    %19 = arith.addf %15, %18 : vector<16x1xf32>
    %20 = math.rsqrt %19 : vector<16x1xf32>
    %21 = vector.broadcast %20 : vector<16x1xf32> to vector<16x128xf32>
    %22 = arith.mulf %17, %21 : vector<16x128xf32>
    %23 = vector.broadcast %1 : vector<1x128xf32> to vector<16x128xf32>
    %24 = arith.mulf %22, %23 : vector<16x128xf32>
    %25 = vector.broadcast %2 : vector<1x128xf32> to vector<16x128xf32>
    %26 = arith.addf %24, %25 : vector<16x128xf32>
    %27 = arith.truncf %26 : vector<16x128xf32> to vector<16x128xbf16>
    %c0_8 = arith.constant 0 : index
    %c0_9 = arith.constant 0 : index
    %28 = vector.load %arg3[%c0_8, %c0_9] : memref<128x256xbf16, #tpu.memory_space<vmem>>, vector<128x256xbf16>
    %cst_10 = arith.constant dense<0.000000e+00> : vector<16x256xf32>
    %29 = tpu.matmul %27, %28, %cst_10 {dimension_numbers = #tpu.dot_dimension_numbers<[1], [0], [0], [1], [0, 0, 1, 1], [], []>} : vector<16x128xbf16>, vector<128x256xbf16>, vector<16x256xf32> -> vector<16x256xf32>
    %c0_11 = arith.constant 0 : index
    %c0_12 = arith.constant 0 : index
    %30 = vector.load %arg2[%c0_11, %c0_12] : memref<8x256xf32, #tpu.memory_space<vmem>>, vector<1x256xf32>
    %31 = vector.broadcast %30 : vector<1x256xf32> to vector<16x256xf32>
    %32 = arith.addf %29, %31 : vector<16x256xf32>
    %33 = vector.extract_strided_slice %32 {offsets = [0, 0], sizes = [16, 128], strides = [1, 1]} : vector<16x256xf32> to vector<16x128xf32>
    %cst_13 = arith.constant 5.000000e-01 : f32
    %34 = vector.broadcast %cst_13 : f32 to vector<16x128xf32>
    %35 = arith.mulf %34, %33 : vector<16x128xf32>
    %cst_14 = arith.constant 0.707106769 : f32
    %36 = vector.broadcast %cst_14 : f32 to vector<16x128xf32>
    %37 = arith.mulf %33, %36 : vector<16x128xf32>
    %38 = math.erf %37 : vector<16x128xf32>
    %cst_15 = arith.constant 1.000000e+00 : f32
    %39 = vector.broadcast %cst_15 : f32 to vector<16x128xf32>
    %40 = arith.addf %39, %38 : vector<16x128xf32>
    %41 = arith.mulf %35, %40 : vector<16x128xf32>
    %42 = vector.extract_strided_slice %32 {offsets = [0, 128], sizes = [16, 128], strides = [1, 1]} : vector<16x256xf32> to vector<16x128xf32>
    %43 = arith.mulf %41, %42 : vector<16x128xf32>
    %44 = arith.truncf %43 : vector<16x128xf32> to vector<16x128xbf16>
    %c0_16 = arith.constant 0 : index
    %c0_17 = arith.constant 0 : index
    %45 = vector.load %arg4[%c0_16, %c0_17] : memref<128x128xbf16, #tpu.memory_space<vmem>>, vector<128x128xbf16>
    %cst_18 = arith.constant dense<0.000000e+00> : vector<16x128xf32>
    %46 = tpu.matmul %44, %45, %cst_18 {dimension_numbers = #tpu.dot_dimension_numbers<[1], [0], [0], [1], [0, 0, 1, 1], [], []>} : vector<16x128xbf16>, vector<128x128xbf16>, vector<16x128xf32> -> vector<16x128xf32>
    %c3 = arith.constant 3 : index
    %c0_19 = arith.constant 0 : index
    %47 = vector.load %arg2[%c3, %c0_19] : memref<8x256xf32, #tpu.memory_space<vmem>>, vector<1x128xf32>
    %48 = vector.broadcast %47 : vector<1x128xf32> to vector<16x128xf32>
    %49 = arith.addf %46, %48 : vector<16x128xf32>
    %50 = arith.addf %49, %0 : vector<16x128xf32>
    %c0_20 = arith.constant 0 : index
    %c0_21 = arith.constant 0 : index
    %51 = vector.load %arg5[%c0_20, %c0_21] : memref<16x128xf32, #tpu.memory_space<vmem>>, vector<16x128xf32>
    tpu.vector_store %arg5[%c0_20, %c0_21], %50 {strides = array<i32>} : memref<16x128xf32, #tpu.memory_space<vmem>>, vector<16x128xf32>,
    return
  }
  func.func @transform_0(%arg0: i32) -> (i32, i32) {
    %c0_i32 = arith.constant 0 : i32
    %c0_i32_0 = arith.constant 0 : i32
    return %arg0, %c0_i32 : i32, i32
  }
  func.func @transform_1(%arg0: i32) -> (i32, i32) {
    %c0_i32 = arith.constant 0 : i32
    %c0_i32_0 = arith.constant 0 : i32
    %c0_i32_1 = arith.constant 0 : i32
    return %c0_i32, %c0_i32_0 : i32, i32
  }
  func.func @transform_2(%arg0: i32) -> (i32, i32) {
    %c0_i32 = arith.constant 0 : i32
    %c0_i32_0 = arith.constant 0 : i32
    %c0_i32_1 = arith.constant 0 : i32
    return %c0_i32, %c0_i32_0 : i32, i32
  }
  func.func @transform_3(%arg0: i32) -> (i32, i32) {
    %c0_i32 = arith.constant 0 : i32
    %c0_i32_0 = arith.constant 0 : i32
    %c0_i32_1 = arith.constant 0 : i32
    return %c0_i32, %c0_i32_0 : i32, i32
  }
  func.func @transform_4(%arg0: i32) -> (i32, i32) {
    %c0_i32 = arith.constant 0 : i32
    %c0_i32_0 = arith.constant 0 : i32
    return %arg0, %c0_i32 : i32, i32
  }
}

module attributes {stable_mosaic.version = 11 : i64} {
  func.func @_ffn_kernel_resident(%arg0: i32, %arg1: memref<16x128xf32, #tpu.memory_space<vmem>>, %arg2: memref<8x256xf32, #tpu.memory_space<vmem>>, %arg3: memref<128x256xbf16, #tpu.memory_space<vmem>>, %arg4: memref<128x128xbf16, #tpu.memory_space<vmem>>, %arg5: memref<16x128xf32, #tpu.memory_space<vmem>>) attributes {dimension_semantics = [#tpu.dimension_semantics<parallel>], iteration_bounds = array<i64: 1>, scalar_prefetch = 0 : i64, scratch_operands = 0 : i64, tpu.core_type = #tpu.core_type<tc>, window_params = [{transform_indices = @transform_0, window_bounds = array<i64: 16, 128>}, {pipeline_mode = #tpu.pipeline_mode<synchronous>, transform_indices = @transform_1, window_bounds = array<i64: 8, 256>}, {pipeline_mode = #tpu.pipeline_mode<synchronous>, transform_indices = @transform_2, window_bounds = array<i64: 128, 256>}, {pipeline_mode = #tpu.pipeline_mode<synchronous>, transform_indices = @transform_3, window_bounds = array<i64: 128, 128>}, {transform_indices = @transform_4, window_bounds = array<i64: 16, 128>}]} {
    %c0 = arith.constant 0 : index
    %c0_0 = arith.constant 0 : index
    %0 = vector.load %arg1[%c0, %c0_0] : memref<16x128xf32, #tpu.memory_space<vmem>>, vector<16x128xf32>
    %c1 = arith.constant 1 : index
    %c0_1 = arith.constant 0 : index
    %1 = vector.load %arg2[%c1, %c0_1] : memref<8x256xf32, #tpu.memory_space<vmem>>, vector<1x128xf32>
    %c2 = arith.constant 2 : index
    %c0_2 = arith.constant 0 : index
    %2 = vector.load %arg2[%c2, %c0_2] : memref<8x256xf32, #tpu.memory_space<vmem>>, vector<1x128xf32>
    %cst = arith.constant dense<0.000000e+00> : vector<16xf32>
    %3 = vector.multi_reduction <add>, %0, %cst [1] : vector<16x128xf32> to vector<16xf32>
    %4 = vector.shape_cast %3 : vector<16xf32> to vector<16x1xf32>
    %5 = arith.mulf %0, %0 : vector<16x128xf32>
    %cst_3 = arith.constant dense<0.000000e+00> : vector<16xf32>
    %6 = vector.multi_reduction <add>, %5, %cst_3 [1] : vector<16x128xf32> to vector<16xf32>
    %7 = vector.shape_cast %6 : vector<16xf32> to vector<16x1xf32>
    %cst_4 = arith.constant 3.125000e-02 : f32
    %8 = vector.broadcast %cst_4 : f32 to vector<16x1xf32>
    %9 = arith.mulf %4, %8 : vector<16x1xf32>
    %cst_5 = arith.constant 3.125000e-02 : f32
    %10 = vector.broadcast %cst_5 : f32 to vector<16x1xf32>
    %11 = arith.mulf %7, %10 : vector<16x1xf32>
    %12 = arith.mulf %9, %9 : vector<16x1xf32>
    %13 = arith.subf %11, %12 : vector<16x1xf32>
    %cst_6 = arith.constant 0.000000e+00 : f32
    %14 = vector.broadcast %cst_6 : f32 to vector<16x1xf32>
    %15 = arith.maximumf %13, %14 : vector<16x1xf32>
    %16 = vector.broadcast %9 : vector<16x1xf32> to vector<16x128xf32>
    %17 = arith.subf %0, %16 : vector<16x128xf32>
    %cst_7 = arith.constant 9.99999974E-6 : f32
    %18 = vector.broadcast %cst_7 : f32 to vector<16x1xf32>
    %19 = arith.addf %15, %18 : vector<16x1xf32>
    %20 = math.rsqrt %19 : vector<16x1xf32>
    %21 = vector.broadcast %20 : vector<16x1xf32> to vector<16x128xf32>
    %22 = arith.mulf %17, %21 : vector<16x128xf32>
    %23 = vector.broadcast %1 : vector<1x128xf32> to vector<16x128xf32>
    %24 = arith.mulf %22, %23 : vector<16x128xf32>
    %25 = vector.broadcast %2 : vector<1x128xf32> to vector<16x128xf32>
    %26 = arith.addf %24, %25 : vector<16x128xf32>
    %27 = arith.truncf %26 : vector<16x128xf32> to vector<16x128xbf16>
    %c0_8 = arith.constant 0 : index
    %c0_9 = arith.constant 0 : index
    %28 = vector.load %arg3[%c0_8, %c0_9] : memref<128x256xbf16, #tpu.memory_space<vmem>>, vector<128x256xbf16>
    %cst_10 = arith.constant dense<0.000000e+00> : vector<16x256xf32>
    %29 = tpu.matmul %27, %28, %cst_10 {dimension_numbers = #tpu.dot_dimension_numbers<[1], [0], [0], [1], [0, 0, 1, 1], [], []>} : vector<16x128xbf16>, vector<128x256xbf16>, vector<16x256xf32> -> vector<16x256xf32>
    %c0_11 = arith.constant 0 : index
    %c0_12 = arith.constant 0 : index
    %30 = vector.load %arg2[%c0_11, %c0_12] : memref<8x256xf32, #tpu.memory_space<vmem>>, vector<1x256xf32>
    %31 = vector.broadcast %30 : vector<1x256xf32> to vector<16x256xf32>
    %32 = arith.addf %29, %31 : vector<16x256xf32>
    %33 = vector.extract_strided_slice %32 {offsets = [0, 0], sizes = [16, 128], strides = [1, 1]} : vector<16x256xf32> to vector<16x128xf32>
    %cst_13 = arith.constant 5.000000e-01 : f32
    %34 = vector.broadcast %cst_13 : f32 to vector<16x128xf32>
    %35 = arith.mulf %34, %33 : vector<16x128xf32>
    %cst_14 = arith.constant 0.707106769 : f32
    %36 = vector.broadcast %cst_14 : f32 to vector<16x128xf32>
    %37 = arith.mulf %33, %36 : vector<16x128xf32>
    %38 = math.erf %37 : vector<16x128xf32>
    %cst_15 = arith.constant 1.000000e+00 : f32
    %39 = vector.broadcast %cst_15 : f32 to vector<16x128xf32>
    %40 = arith.addf %39, %38 : vector<16x128xf32>
    %41 = arith.mulf %35, %40 : vector<16x128xf32>
    %42 = vector.extract_strided_slice %32 {offsets = [0, 128], sizes = [16, 128], strides = [1, 1]} : vector<16x256xf32> to vector<16x128xf32>
    %43 = arith.mulf %41, %42 : vector<16x128xf32>
    %44 = arith.truncf %43 : vector<16x128xf32> to vector<16x128xbf16>
    %c0_16 = arith.constant 0 : index
    %c0_17 = arith.constant 0 : index
    %45 = vector.load %arg4[%c0_16, %c0_17] : memref<128x128xbf16, #tpu.memory_space<vmem>>, vector<128x128xbf16>
    %cst_18 = arith.constant dense<0.000000e+00> : vector<16x128xf32>
    %46 = tpu.matmul %44, %45, %cst_18 {dimension_numbers = #tpu.dot_dimension_numbers<[1], [0], [0], [1], [0, 0, 1, 1], [], []>} : vector<16x128xbf16>, vector<128x128xbf16>, vector<16x128xf32> -> vector<16x128xf32>
    %c3 = arith.constant 3 : index
    %c0_19 = arith.constant 0 : index
    %47 = vector.load %arg2[%c3, %c0_19] : memref<8x256xf32, #tpu.memory_space<vmem>>, vector<1x128xf32>
    %48 = vector.broadcast %47 : vector<1x128xf32> to vector<16x128xf32>
    %49 = arith.addf %46, %48 : vector<16x128xf32>
    %50 = arith.addf %49, %0 : vector<16x128xf32>
    %c0_20 = arith.constant 0 : index
    %c0_21 = arith.constant 0 : index
    %51 = vector.load %arg5[%c0_20, %c0_21] : memref<16x128xf32, #tpu.memory_space<vmem>>, vector<16x128xf32>
    tpu.vector_store %arg5[%c0_20, %c0_21], %50 {strides = array<i32>} : memref<16x128xf32, #tpu.memory_space<vmem>>, vector<16x128xf32>,
    return
  }
  func.func @transform_0(%arg0: i32) -> (i32, i32) {
    %c0_i32 = arith.constant 0 : i32
    %c0_i32_0 = arith.constant 0 : i32
    return %arg0, %c0_i32 : i32, i32
  }
  func.func @transform_1(%arg0: i32) -> (i32, i32) {
    %c0_i32 = arith.constant 0 : i32
    %c0_i32_0 = arith.constant 0 : i32
    %c0_i32_1 = arith.constant 0 : i32
    return %c0_i32, %c0_i32_0 : i32, i32
  }
  func.func @transform_2(%arg0: i32) -> (i32, i32) {
    %c0_i32 = arith.constant 0 : i32
    %c0_i32_0 = arith.constant 0 : i32
    %c0_i32_1 = arith.constant 0 : i32
    return %c0_i32, %c0_i32_0 : i32, i32
  }
  func.func @transform_3(%arg0: i32) -> (i32, i32) {
    %c0_i32 = arith.constant 0 : i32
    %c0_i32_0 = arith.constant 0 : i32
    %c0_i32_1 = arith.constant 0 : i32
    return %c0_i32, %c0_i32_0 : i32, i32
  }
  func.func @transform_4(%arg0: i32) -> (i32, i32) {
    %c0_i32 = arith.constant 0 : i32
    %c0_i32_0 = arith.constant 0 : i32
    return %arg0, %c0_i32 : i32, i32
  }
}

</mosaic_0001>

<llo_original>
// kernel: tpu_custom_call.1
$region0: #{tpu_custom_call.1}
  #allocation0 [shape = 'u32[]', space=smem, size = 0x4, offset = 0x4, fixed_abs, tag = 'smem constant byte address 0x4 - core index']
  #allocation1 [shape = 'u32[72,128]{1,0:T(1,128)}', space=vmem, size = 0x9000, scoped, tag = 'internal scratch']
  %s0 = inlined_call_operand.hbm [shape: f32[16,128], index: 0, kind: input, shape index: {}]
  %s1 = inlined_call_operand.hbm [shape: f32[8,256], index: 1, kind: input, shape index: {}]
  %s2 = inlined_call_operand.hbm [shape: bf16[128,256], index: 2, kind: input, shape index: {}]
  %s3 = inlined_call_operand.hbm [shape: bf16[128,128], index: 3, kind: input, shape index: {}]
  %s4 = inlined_call_operand.hbm [shape: f32[16,128], index: 4, kind: output, shape index: {}]
  %s5 = sld [smem:[#allocation0]]
  $region42: #{tpu_custom_call.1} parent=0
    _
  %s7 = ssub.s32 1, %s5
  %s8 = scalar_select 0, %s7, %s5
  $region1: #{tpu_custom_call.1} parent=0
    #allocation2 [shape = 'u8[8192]{0}', space=vmem, size = 0x2000, scoped, tag = 'input window, operand 0, single buffered']
    #allocation3 [shape = 's32[1]{0}', space=sflag, size = 0x4, scoped, tag = 'scoped memory for tpu_custom_call.1']
    #allocation4 [shape = 's32[1]{0}', space=sflag, size = 0x4, scoped, tag = 'scoped memory for tpu_custom_call.1']
    #allocation5 [shape = 'u8[8192]{0}', space=vmem, size = 0x2000, scoped, tag = 'input window, operand 1, single buffered']
    #allocation6 [shape = 's32[1]{0}', space=sflag, size = 0x4, scoped, tag = 'scoped memory for tpu_custom_call.1']
    #allocation7 [shape = 'u8[65536]{0}', space=vmem, size = 0x10000, scoped, tag = 'input window, operand 2, single buffered']
    #allocation8 [shape = 'u8[32768]{0}', space=vmem, size = 0x8000, scoped, tag = 'input window, operand 3, single buffered']
    #allocation9 [shape = 's32[1]{0}', space=sflag, size = 0x4, scoped, tag = 'scoped memory for tpu_custom_call.1']
    #allocation10 [shape = 'u8[8192]{0}', space=vmem, size = 0x2000, scoped, tag = 'output window, operand 0, single buffered']
    %9 = vsyncpa [#allocation3], 0
    %10 = vsyncpa [#allocation6], 0
    %11 = vsyncpa [#allocation9], 0
    %12 = vsyncpa [#allocation4], 0
    // Predicated region
    $region2: #{tpu_custom_call.1} parent=1 // pred_check
      _
    $region3: #{tpu_custom_call.1} parent=1 // pred_check_branch
      %14 = sbr.rel (0) target = $region5
    $region4: #{tpu_custom_call.1} parent=1 // pred_region
      %16 = vsyncadd [#allocation3], 0
      %s17 = sshll.u32 %s0, 4
      %s18 = int_to_ptr.hbm [resolvable:$true] %s17
      %s19 = sshll.u32 [#allocation2], 4
      %s20 = int_to_ptr.vmem [resolvable:$true] %s19
      %25 = dma.hbm_to_vmem [thread:$0]  %s18, 256, %s20, [#allocation3], 128, 128, 8
    $region5: #{tpu_custom_call.1} parent=1 // pred_fallthru
      _
    // Predicated region
    $region6: #{tpu_custom_call.1} parent=1 // pred_check
      _
    $region7: #{tpu_custom_call.1} parent=1 // pred_check_branch
      %27 = sbr.rel (0) target = $region9
    $region8: #{tpu_custom_call.1} parent=1 // pred_region
      %29 = vsyncadd [#allocation6], 0
      %s31 = sshll.u32 %s1, 4
      %s32 = int_to_ptr.hbm [resolvable:$true] %s31
      %s33 = sshll.u32 [#allocation5], 4
      %s34 = int_to_ptr.vmem [resolvable:$true] %s33
      %36 = dma.hbm_to_vmem [thread:$0]  %s32, 256, %s34, [#allocation6]
    $region9: #{tpu_custom_call.1} parent=1 // pred_fallthru
      _
    // Predicated region
    $region10: #{tpu_custom_call.1} parent=1 // pred_check
      _
    $region11: #{tpu_custom_call.1} parent=1 // pred_check_branch
      %38 = sbr.rel (0) target = $region13
    $region12: #{tpu_custom_call.1} parent=1 // pred_region
      %40 = vsyncadd [#allocation6], 0
      %s41 = sshll.u32 %s2, 4
      %s42 = int_to_ptr.hbm [resolvable:$true] %s41
      %s43 = sshll.u32 [#allocation7], 4
      %s44 = int_to_ptr.vmem [resolvable:$true] %s43
      %49 = dma.hbm_to_vmem [thread:$0]  %s42, 2048, %s44, [#allocation6], 128, 128, 8
    $region13: #{tpu_custom_call.1} parent=1 // pred_fallthru
      _
    // Predicated region
    $region14: #{tpu_custom_call.1} parent=1 // pred_check
      _
    $region15: #{tpu_custom_call.1} parent=1 // pred_check_branch
      %51 = sbr.rel (0) target = $region17
    $region16: #{tpu_custom_call.1} parent=1 // pred_region
      %53 = vsyncadd [#allocation9], 0
      %s54 = sshll.u32 %s3, 4
      %s55 = int_to_ptr.hbm [resolvable:$true] %s54
      %s56 = sshll.u32 [#allocation8], 4
      %s57 = int_to_ptr.vmem [resolvable:$true] %s56
      %62 = dma.hbm_to_vmem [thread:$0]  %s55, 1024, %s57, [#allocation9], 64, 64, 4
    $region17: #{tpu_custom_call.1} parent=1 // pred_fallthru
      _
    // Predicated region
    $region18: #{tpu_custom_call.1} parent=1 // pred_check
      _
    $region19: #{tpu_custom_call.1} parent=1 // pred_check_branch
      %64 = sbr.rel (0) target = $region21
    $region20: #{tpu_custom_call.1} parent=1 // pred_region
      %66 = dma.done [#allocation3], 256
    $region21: #{tpu_custom_call.1} parent=1 // pred_fallthru
      _
    // Predicated region
    $region22: #{tpu_custom_call.1} parent=1 // pred_check
      _
    $region23: #{tpu_custom_call.1} parent=1 // pred_check_branch
      %68 = sbr.rel (0) target = $region25
    $region24: #{tpu_custom_call.1} parent=1 // pred_region
      %70 = dma.done [#allocation6], 256
    $region25: #{tpu_custom_call.1} parent=1 // pred_fallthru
      _
    // Predicated region
    $region26: #{tpu_custom_call.1} parent=1 // pred_check
      _
    $region27: #{tpu_custom_call.1} parent=1 // pred_check_branch
      %72 = sbr.rel (0) target = $region29
    $region28: #{tpu_custom_call.1} parent=1 // pred_region
      %74 = dma.done [#allocation6], 2048
    $region29: #{tpu_custom_call.1} parent=1 // pred_fallthru
      _
    // Predicated region
    $region30: #{tpu_custom_call.1} parent=1 // pred_check
      _
    $region31: #{tpu_custom_call.1} parent=1 // pred_check_branch
      %76 = sbr.rel (0) target = $region33
    $region32: #{tpu_custom_call.1} parent=1 // pred_region
      %78 = dma.done [#allocation9], 1024
    $region33: #{tpu_custom_call.1} parent=1 // pred_fallthru
      _
    %v79 = vld [vmem:[#allocation2] sm:$0xff]
    %v80 = vld [vmem:[#allocation2 + $0x8] sm:$0xff]
    %v81 = vld [vmem:[#allocation5 + $0x1] ss:$0 sm:$0xff]
    %v82 = vld [vmem:[#allocation5 + $0x2] ss:$0 sm:$0xff]
    %83 = vadd.xlane.f32.xlu0 %v79
    %v84 = vpop.xlane.xlu0 %83
    %85 = vadd.xlane.f32.xlu0 %v80
    %v86 = vpop.xlane.xlu0 %85
    %v87 = vmul.f32 %v79, %v79
    %v88 = vmul.f32 %v80, %v80
    %89 = vadd.xlane.f32.xlu0 %v87
    %v90 = vpop.xlane.xlu0 %89
    %91 = vadd.xlane.f32.xlu0 %v88
    %v92 = vpop.xlane.xlu0 %91
    %v93 = vmul.f32 %v84, 0.03125
    %v94 = vmul.f32 %v86, 0.03125
    %v95 = vmul.f32 %v90, 0.03125
    %v96 = vmul.f32 %v92, 0.03125
    %v97 = vmul.f32 %v93, %v93
    %v98 = vmul.f32 %v94, %v94
    %v99 = vsub.f32 %v95, %v97
    %v100 = vsub.f32 %v96, %v98
    %v101 = vmax.f32 %v99, 0.0
    %v102 = vmax.f32 %v100, 0.0
    %v103 = vsub.f32 %v79, %v93
    %v104 = vsub.f32 %v80, %v94
    %v105 = vadd.f32 %v101, 1e-05
    %v106 = vadd.f32 %v102, 1e-05
    %v107 = vrsqrt.pop %v105
    %v108 = vmul.f32 %v107, %v105
    %v109 = vmul.f32 %v108, %v107
    %v110 = vmul.f32 0.5, %v109
    %v111 = vsub.f32 1.5, %v110
    %v112 = vmul.f32 %v107, %v111
    %vm113 = vweird.f32 %v105
    %vm114 = vweird.f32 %v107
    %vm115 = vmor %vm113, %vm114
    %v116 = vsel %vm115, %v107, %v112
    %v117 = vrsqrt.pop %v106
    %v118 = vmul.f32 %v117, %v106
    %v119 = vmul.f32 %v118, %v117
    %v120 = vmul.f32 0.5, %v119
    %v121 = vsub.f32 1.5, %v120
    %v122 = vmul.f32 %v117, %v121
    %vm123 = vweird.f32 %v106
    %vm124 = vweird.f32 %v117
    %vm125 = vmor %vm123, %vm124
    %v126 = vsel %vm125, %v117, %v122
    %v127 = vmul.f32 %v103, %v116
    %v128 = vmul.f32 %v104, %v126
    %v129 = vmul.f32 %v127, %v81
    %v130 = vmul.f32 %v128, %v81
    %v131 = vadd.f32 %v129, %v82
    %v132 = vadd.f32 %v130, %v82
    %v133 = vpack.c.bf16 %v132, %v131
    %v134 = vld [vmem:[#allocation7] sm:$0xff]
    %v135 = vld [vmem:[#allocation7 + $0x8] sm:$0xff]
    %v136 = vld [vmem:[#allocation7 + $0x10] sm:$0xff]
    %v137 = vld [vmem:[#allocation7 + $0x18] sm:$0xff]
    %v138 = vld [vmem:[#allocation7 + $0x20] sm:$0xff]
    %v139 = vld [vmem:[#allocation7 + $0x28] sm:$0xff]
    %v140 = vld [vmem:[#allocation7 + $0x30] sm:$0xff]
    %v141 = vld [vmem:[#allocation7 + $0x38] sm:$0xff]
    %v142 = vld [vmem:[#allocation7 + $0x40] sm:$0xff]
    %v143 = vld [vmem:[#allocation7 + $0x48] sm:$0xff]
    %v144 = vld [vmem:[#allocation7 + $0x50] sm:$0xff]
    %v145 = vld [vmem:[#allocation7 + $0x58] sm:$0xff]
    %v146 = vld [vmem:[#allocation7 + $0x60] sm:$0xff]
    %v147 = vld [vmem:[#allocation7 + $0x68] sm:$0xff]
    %v148 = vld [vmem:[#allocation7 + $0x70] sm:$0xff]
    %v149 = vld [vmem:[#allocation7 + $0x78] sm:$0xff]
    %v150 = vld [vmem:[#allocation5] ss:$8 sm:$0x3]
    %v152 = vperm.slane %v150, 0
    %v153 = vperm.slane %v150, 1
    %v172 = vunpack.c.l.b16 %v134
    %v173 = vunpack.c.h.b16 %v134
    %v174 = vunpack.c.l.b16 %v135
    %v175 = vunpack.c.h.b16 %v135
    %v176 = vunpack.c.l.b16 %v136
    %v177 = vunpack.c.h.b16 %v136
    %v178 = vunpack.c.l.b16 %v137
    %v179 = vunpack.c.h.b16 %v137
    %v180 = vunpack.c.l.b16 %v138
    %v181 = vunpack.c.h.b16 %v138
    %v182 = vunpack.c.l.b16 %v139
    %v183 = vunpack.c.h.b16 %v139
    %v184 = vunpack.c.l.b16 %v140
    %v185 = vunpack.c.h.b16 %v140
    %v186 = vunpack.c.l.b16 %v141
    %v187 = vunpack.c.h.b16 %v141
    %v188 = vunpack.c.l.b16 %v142
    %v189 = vunpack.c.h.b16 %v142
    %v190 = vunpack.c.l.b16 %v143
    %v191 = vunpack.c.h.b16 %v143
    %v192 = vunpack.c.l.b16 %v144
    %v193 = vunpack.c.h.b16 %v144
    %v194 = vunpack.c.l.b16 %v145
    %v195 = vunpack.c.h.b16 %v145
    %v196 = vunpack.c.l.b16 %v146
    %v197 = vunpack.c.h.b16 %v146
    %v198 = vunpack.c.l.b16 %v147
    %v199 = vunpack.c.h.b16 %v147
    %v200 = vunpack.c.l.b16 %v148
    %v201 = vunpack.c.h.b16 %v148
    %v202 = vunpack.c.l.b16 %v149
    %v203 = vunpack.c.h.b16 %v149
    %v204 = vpack.c.b16 %v174, %v172
    %v205 = vpack.c.b16 %v175, %v173
    %v206 = vpack.c.b16 %v178, %v176
    %v207 = vpack.c.b16 %v179, %v177
    %v208 = vpack.c.b16 %v182, %v180
    %v209 = vpack.c.b16 %v183, %v181
    %v210 = vpack.c.b16 %v186, %v184
    %v211 = vpack.c.b16 %v187, %v185
    %v212 = vpack.c.b16 %v190, %v188
    %v213 = vpack.c.b16 %v191, %v189
    %v214 = vpack.c.b16 %v194, %v192
    %v215 = vpack.c.b16 %v195, %v193
    %v216 = vpack.c.b16 %v198, %v196
    %v217 = vpack.c.b16 %v199, %v197
    %v218 = vpack.c.b16 %v202, %v200
    %v219 = vpack.c.b16 %v203, %v201
    %236 = vmatpush.bf16.msra.mxu0 %v218
    %237 = vmatpush.bf16.msra.mxu0 %v216
    %238 = vmatpush.bf16.msra.mxu0 %v214
    %239 = vmatpush.bf16.msra.mxu0 %v212
    %240 = vmatpush.bf16.msra.mxu0 %v210
    %241 = vmatpush.bf16.msra.mxu0 %v208
    %242 = vmatpush.bf16.msra.mxu0 %v206
    %243 = vmatpush.bf16.msra.mxu0 %v204
    %244 = vmatmul.bf16.gmra.mxu0 %v133
    %v245 = vpop.f32.mrf.mxu0
    %v246 = vadd.f32 %v152, %v245
    %v247 = vpop.f32.mrf.mxu0
    %v248 = vadd.f32 %v152, %v247
    %249 = vdwg.mxu0
    %250 = vmatpush.bf16.msra.mxu0 %v219
    %251 = vmatpush.bf16.msra.mxu0 %v217
    %252 = vmatpush.bf16.msra.mxu0 %v215
    %253 = vmatpush.bf16.msra.mxu0 %v213
    %254 = vmatpush.bf16.msra.mxu0 %v211
    %255 = vmatpush.bf16.msra.mxu0 %v209
    %256 = vmatpush.bf16.msra.mxu0 %v207
    %257 = vmatpush.bf16.msra.mxu0 %v205
    %258 = vmatmul.bf16.gmra.mxu0 %v133
    %v259 = vpop.f32.mrf.mxu0
    %v260 = vadd.f32 %v153, %v259
    %v261 = vpop.f32.mrf.mxu0
    %v262 = vadd.f32 %v153, %v261
    %263 = vdwg.mxu0
    %v264 = vmul.f32 %v246, 0.5
    %v265 = vmul.f32 %v248, 0.5
    %v266 = vmul.f32 %v246, 0.70710677
    %v267 = vmul.f32 %v248, 0.70710677
    %v268 = vmul.f32 %v266, %v266
    %v269 = vmin.f32 16.0, %v268
    %v270 = vmul.f32 %v269, 2.1237322e-06
    %v271 = vadd.f32 %v270, 0.00028619796
    %v272 = vmul.f32 %v269, %v271
    %v273 = vadd.f32 %v272, 0.0036580483
    %v274 = vmul.f32 %v269, %v273
    %v275 = vadd.f32 %v274, 0.05243302
    %v276 = vmul.f32 %v269, %v275
    %v277 = vadd.f32 %v276, 0.18741608
    %v278 = vmul.f32 %v269, %v277
    %v279 = vadd.f32 %v278, 1.1283791
    %v280 = vmul.f32 %v266, %v279
    %v281 = vmul.f32 %v269, 3.8918573e-05
    %v282 = vadd.f32 %v281, 0.001143296
    %v283 = vmul.f32 %v269, %v282
    %v284 = vadd.f32 %v283, 0.014752088
    %v285 = vmul.f32 %v269, %v284
    %v286 = vadd.f32 %v285, 0.112945676
    %v287 = vmul.f32 %v269, %v286
    %v288 = vadd.f32 %v287, 0.4994258
    %v289 = vmul.f32 %v269, %v288
    %v290 = vadd.f32 %v289, 1.0
    %v291 = vrcp.pop %v290
    %v292 = vmul.f32 %v290, %v291
    %v293 = vsub.f32 1.0, %v292
    %v294 = vmul.f32 %v291, %v293
    %v295 = vadd.f32 %v291, %v294
    %vm296 = vweird.f32 %v290
    %vm297 = vweird.f32 %v291
    %vm298 = vmor %vm296, %vm297
    %v299 = vsel %vm298, %v291, %v295
    %v300 = vand.u32 2147483647, %v290
    %vm301 = vcmp.eq.f32.partialorder %v300, 8.507059e+37
    %v302 = vand.u32 %v290, 2147483648
    %v303 = vor.u32 1.1754944e-38, %v302
    %v304 = vsel %vm301, %v303, %v299
    %v305 = vmul.f32 %v280, %v304
    %v306 = vmin.f32 %v305, 1.0
    %v307 = vmax.f32 %v306, -1.0
    %v308 = vmul.f32 %v267, %v267
    %v309 = vmin.f32 16.0, %v308
    %v310 = vmul.f32 %v309, 2.1237322e-06
    %v311 = vadd.f32 %v310, 0.00028619796
    %v312 = vmul.f32 %v309, %v311
    %v313 = vadd.f32 %v312, 0.0036580483
    %v314 = vmul.f32 %v309, %v313
    %v315 = vadd.f32 %v314, 0.05243302
    %v316 = vmul.f32 %v309, %v315
    %v317 = vadd.f32 %v316, 0.18741608
    %v318 = vmul.f32 %v309, %v317
    %v319 = vadd.f32 %v318, 1.1283791
    %v320 = vmul.f32 %v267, %v319
    %v321 = vmul.f32 %v309, 3.8918573e-05
    %v322 = vadd.f32 %v321, 0.001143296
    %v323 = vmul.f32 %v309, %v322
    %v324 = vadd.f32 %v323, 0.014752088
    %v325 = vmul.f32 %v309, %v324
    %v326 = vadd.f32 %v325, 0.112945676
    %v327 = vmul.f32 %v309, %v326
    %v328 = vadd.f32 %v327, 0.4994258
    %v329 = vmul.f32 %v309, %v328
    %v330 = vadd.f32 %v329, 1.0
    %v331 = vrcp.pop %v330
    %v332 = vmul.f32 %v330, %v331
    %v333 = vsub.f32 1.0, %v332
    %v334 = vmul.f32 %v331, %v333
    %v335 = vadd.f32 %v331, %v334
    %vm336 = vweird.f32 %v330
    %vm337 = vweird.f32 %v331
    %vm338 = vmor %vm336, %vm337
    %v339 = vsel %vm338, %v331, %v335
    %v340 = vand.u32 2147483647, %v330
    %vm341 = vcmp.eq.f32.partialorder %v340, 8.507059e+37
    %v342 = vand.u32 %v330, 2147483648
    %v343 = vor.u32 1.1754944e-38, %v342
    %v344 = vsel %vm341, %v343, %v339
    %v345 = vmul.f32 %v320, %v344
    %v346 = vmin.f32 %v345, 1.0
    %v347 = vmax.f32 %v346, -1.0
    %v348 = vadd.f32 %v307, 1.0
    %v349 = vadd.f32 %v347, 1.0
    %v350 = vmul.f32 %v264, %v348
    %v351 = vmul.f32 %v265, %v349
    %v352 = vmul.f32 %v350, %v260
    %v353 = vmul.f32 %v351, %v262
    %v354 = vpack.c.bf16 %v353, %v352
    %v355 = vld [vmem:[#allocation8] sm:$0xf]
    %v356 = vld [vmem:[#allocation8 + $0x4] sm:$0xf]
    %v357 = vld [vmem:[#allocation8 + $0x8] sm:$0xf]
    %v358 = vld [vmem:[#allocation8 + $0xc] sm:$0xf]
    %v359 = vld [vmem:[#allocation8 + $0x10] sm:$0xf]
    %v360 = vld [vmem:[#allocation8 + $0x14] sm:$0xf]
    %v361 = vld [vmem:[#allocation8 + $0x18] sm:$0xf]
    %v362 = vld [vmem:[#allocation8 + $0x1c] sm:$0xf]
    %v363 = vld [vmem:[#allocation8 + $0x20] sm:$0xf]
    %v364 = vld [vmem:[#allocation8 + $0x24] sm:$0xf]
    %v365 = vld [vmem:[#allocation8 + $0x28] sm:$0xf]
    %v366 = vld [vmem:[#allocation8 + $0x2c] sm:$0xf]
    %v367 = vld [vmem:[#allocation8 + $0x30] sm:$0xf]
    %v368 = vld [vmem:[#allocation8 + $0x34] sm:$0xf]
    %v369 = vld [vmem:[#allocation8 + $0x38] sm:$0xf]
    %v370 = vld [vmem:[#allocation8 + $0x3c] sm:$0xf]
    %v371 = vld [vmem:[#allocation5 + $0x3] ss:$0 sm:$0xff]
    %v388 = vunpack.c.l.b16 %v355
    %v389 = vunpack.c.l.b16 %v356
    %v390 = vunpack.c.l.b16 %v357
    %v391 = vunpack.c.l.b16 %v358
    %v392 = vunpack.c.l.b16 %v359
    %v393 = vunpack.c.l.b16 %v360
    %v394 = vunpack.c.l.b16 %v361
    %v395 = vunpack.c.l.b16 %v362
    %v396 = vunpack.c.l.b16 %v363
    %v397 = vunpack.c.l.b16 %v364
    %v398 = vunpack.c.l.b16 %v365
    %v399 = vunpack.c.l.b16 %v366
    %v400 = vunpack.c.l.b16 %v367
    %v401 = vunpack.c.l.b16 %v368
    %v402 = vunpack.c.l.b16 %v369
    %v403 = vunpack.c.l.b16 %v370
    %v404 = vpack.c.b16 %v389, %v388
    %v405 = vpack.c.b16 %v391, %v390
    %v406 = vpack.c.b16 %v393, %v392
    %v407 = vpack.c.b16 %v395, %v394
    %v408 = vpack.c.b16 %v397, %v396
    %v409 = vpack.c.b16 %v399, %v398
    %v410 = vpack.c.b16 %v401, %v400
    %v411 = vpack.c.b16 %v403, %v402
    %420 = vmatpush.bf16.msra.mxu0 %v411
    %421 = vmatpush.bf16.msra.mxu0 %v410
    %422 = vmatpush.bf16.msra.mxu0 %v409
    %423 = vmatpush.bf16.msra.mxu0 %v408
    %424 = vmatpush.bf16.msra.mxu0 %v407
    %425 = vmatpush.bf16.msra.mxu0 %v406
    %426 = vmatpush.bf16.msra.mxu0 %v405
    %427 = vmatpush.bf16.msra.mxu0 %v404
    %428 = vmatmul.bf16.gmra.mxu0 %v354
    %v429 = vpop.f32.mrf.mxu0
    %v430 = vadd.f32 %v371, %v429
    %v431 = vpop.f32.mrf.mxu0
    %v432 = vadd.f32 %v371, %v431
    %433 = vdwg.mxu0
    %v434 = vadd.f32 %v430, %v79
    %v435 = vadd.f32 %v432, %v80
    %436 = vst [vmem:[#allocation10] sm:$0xff] %v434
    %437 = vst [vmem:[#allocation10 + $0x8] sm:$0xff] %v435
    // Predicated region
    $region34: #{tpu_custom_call.1} parent=1 // pred_check
      _
    $region35: #{tpu_custom_call.1} parent=1 // pred_check_branch
      %439 = sbr.rel (0) target = $region37
    $region36: #{tpu_custom_call.1} parent=1 // pred_region
      %441 = vsyncadd [#allocation4], 0
      %s442 = sshll.u32 [#allocation10], 4
      %s443 = int_to_ptr.vmem [resolvable:$true] %s442
      %s444 = sshll.u32 %s4, 4
      %s445 = int_to_ptr.hbm [resolvable:$true] %s444
      %450 = dma.vmem_to_hbm [thread:$0]  %s443, 256, %s445, [#allocation4], 128, 128, 8
    $region37: #{tpu_custom_call.1} parent=1 // pred_fallthru
      _
    // Predicated region
    $region38: #{tpu_custom_call.1} parent=1 // pred_check
      _
    $region39: #{tpu_custom_call.1} parent=1 // pred_check_branch
      %452 = sbr.rel (0) target = $region41
    $region40: #{tpu_custom_call.1} parent=1 // pred_region
      %454 = dma.done [#allocation4], 256
    $region41: #{tpu_custom_call.1} parent=1 // pred_fallthru
      _
    %455 = vsyncpa [#allocation3], 1
    %456 = vsyncpa [#allocation6], 1
    %457 = vsyncpa [#allocation9], 1
    %458 = vsyncpa [#allocation4], 1

// kernel: tpu_custom_call.1
$region0: #{tpu_custom_call.1}
  #allocation0 [shape = 'u32[]', space=smem, size = 0x4, offset = 0x4, fixed_abs, tag = 'smem constant byte address 0x4 - core index']
  #allocation1 [shape = 'u32[72,128]{1,0:T(1,128)}', space=vmem, size = 0x9000, scoped, tag = 'internal scratch']
  %s0 = inlined_call_operand.hbm [shape: f32[16,128], index: 0, kind: input, shape index: {}]
  %s1 = inlined_call_operand.hbm [shape: f32[8,256], index: 1, kind: input, shape index: {}]
  %s2 = inlined_call_operand.hbm [shape: bf16[128,256], index: 2, kind: input, shape index: {}]
  %s3 = inlined_call_operand.hbm [shape: bf16[128,128], index: 3, kind: input, shape index: {}]
  %s4 = inlined_call_operand.hbm [shape: f32[16,128], index: 4, kind: output, shape index: {}]
  %s5 = sld [smem:[#allocation0]]
  $region42: #{tpu_custom_call.1} parent=0
    _
  %s7 = ssub.s32 1, %s5
  %s8 = scalar_select 0, %s7, %s5
  $region1: #{tpu_custom_call.1} parent=0
    #allocation2 [shape = 'u8[8192]{0}', space=vmem, size = 0x2000, scoped, tag = 'input window, operand 0, single buffered']
    #allocation3 [shape = 's32[1]{0}', space=sflag, size = 0x4, scoped, tag = 'scoped memory for tpu_custom_call.1']
    #allocation4 [shape = 's32[1]{0}', space=sflag, size = 0x4, scoped, tag = 'scoped memory for tpu_custom_call.1']
    #allocation5 [shape = 'u8[8192]{0}', space=vmem, size = 0x2000, scoped, tag = 'input window, operand 1, single buffered']
    #allocation6 [shape = 's32[1]{0}', space=sflag, size = 0x4, scoped, tag = 'scoped memory for tpu_custom_call.1']
    #allocation7 [shape = 'u8[65536]{0}', space=vmem, size = 0x10000, scoped, tag = 'input window, operand 2, single buffered']
    #allocation8 [shape = 'u8[32768]{0}', space=vmem, size = 0x8000, scoped, tag = 'input window, operand 3, single buffered']
    #allocation9 [shape = 's32[1]{0}', space=sflag, size = 0x4, scoped, tag = 'scoped memory for tpu_custom_call.1']
    #allocation10 [shape = 'u8[8192]{0}', space=vmem, size = 0x2000, scoped, tag = 'output window, operand 0, single buffered']
    %9 = vsyncpa [#allocation3], 0
    %10 = vsyncpa [#allocation6], 0
    %11 = vsyncpa [#allocation9], 0
    %12 = vsyncpa [#allocation4], 0
    // Predicated region
    $region2: #{tpu_custom_call.1} parent=1 // pred_check
      _
    $region3: #{tpu_custom_call.1} parent=1 // pred_check_branch
      %14 = sbr.rel (0) target = $region5
    $region4: #{tpu_custom_call.1} parent=1 // pred_region
      %16 = vsyncadd [#allocation3], 0
      %s17 = sshll.u32 %s0, 4
      %s18 = int_to_ptr.hbm [resolvable:$true] %s17
      %s19 = sshll.u32 [#allocation2], 4
      %s20 = int_to_ptr.vmem [resolvable:$true] %s19
      %25 = dma.hbm_to_vmem [thread:$0]  %s18, 256, %s20, [#allocation3], 128, 128, 8
    $region5: #{tpu_custom_call.1} parent=1 // pred_fallthru
      _
    // Predicated region
    $region6: #{tpu_custom_call.1} parent=1 // pred_check
      _
    $region7: #{tpu_custom_call.1} parent=1 // pred_check_branch
      %27 = sbr.rel (0) target = $region9
    $region8: #{tpu_custom_call.1} parent=1 // pred_region
      %29 = vsyncadd [#allocation6], 0
      %s31 = sshll.u32 %s1, 4
      %s32 = int_to_ptr.hbm [resolvable:$true] %s31
      %s33 = sshll.u32 [#allocation5], 4
      %s34 = int_to_ptr.vmem [resolvable:$true] %s33
      %36 = dma.hbm_to_vmem [thread:$0]  %s32, 256, %s34, [#allocation6]
    $region9: #{tpu_custom_call.1} parent=1 // pred_fallthru
      _
    // Predicated region
    $region10: #{tpu_custom_call.1} parent=1 // pred_check
      _
    $region11: #{tpu_custom_call.1} parent=1 // pred_check_branch
      %38 = sbr.rel (0) target = $region13
    $region12: #{tpu_custom_call.1} parent=1 // pred_region
      %40 = vsyncadd [#allocation6], 0
      %s41 = sshll.u32 %s2, 4
      %s42 = int_to_ptr.hbm [resolvable:$true] %s41
      %s43 = sshll.u32 [#allocation7], 4
      %s44 = int_to_ptr.vmem [resolvable:$true] %s43
      %49 = dma.hbm_to_vmem [thread:$0]  %s42, 2048, %s44, [#allocation6], 128, 128, 8
    $region13: #{tpu_custom_call.1} parent=1 // pred_fallthru
      _
    // Predicated region
    $region14: #{tpu_custom_call.1} parent=1 // pred_check
      _
    $region15: #{tpu_custom_call.1} parent=1 // pred_check_branch
      %51 = sbr.rel (0) target = $region17
    $region16: #{tpu_custom_call.1} parent=1 // pred_region
      %53 = vsyncadd [#allocation9], 0
      %s54 = sshll.u32 %s3, 4
      %s55 = int_to_ptr.hbm [resolvable:$true] %s54
      %s56 = sshll.u32 [#allocation8], 4
      %s57 = int_to_ptr.vmem [resolvable:$true] %s56
      %62 = dma.hbm_to_vmem [thread:$0]  %s55, 1024, %s57, [#allocation9], 64, 64, 4
    $region17: #{tpu_custom_call.1} parent=1 // pred_fallthru
      _
    // Predicated region
    $region18: #{tpu_custom_call.1} parent=1 // pred_check
      _
    $region19: #{tpu_custom_call.1} parent=1 // pred_check_branch
      %64 = sbr.rel (0) target = $region21
    $region20: #{tpu_custom_call.1} parent=1 // pred_region
      %66 = dma.done [#allocation3], 256
    $region21: #{tpu_custom_call.1} parent=1 // pred_fallthru
      _
    // Predicated region
    $region22: #{tpu_custom_call.1} parent=1 // pred_check
      _
    $region23: #{tpu_custom_call.1} parent=1 // pred_check_branch
      %68 = sbr.rel (0) target = $region25
    $region24: #{tpu_custom_call.1} parent=1 // pred_region
      %70 = dma.done [#allocation6], 256
    $region25: #{tpu_custom_call.1} parent=1 // pred_fallthru
      _
    // Predicated region
    $region26: #{tpu_custom_call.1} parent=1 // pred_check
      _
    $region27: #{tpu_custom_call.1} parent=1 // pred_check_branch
      %72 = sbr.rel (0) target = $region29
    $region28: #{tpu_custom_call.1} parent=1 // pred_region
      %74 = dma.done [#allocation6], 2048
    $region29: #{tpu_custom_call.1} parent=1 // pred_fallthru
      _
    // Predicated region
    $region30: #{tpu_custom_call.1} parent=1 // pred_check
      _
    $region31: #{tpu_custom_call.1} parent=1 // pred_check_branch
      %76 = sbr.rel (0) target = $region33
    $region32: #{tpu_custom_call.1} parent=1 // pred_region
      %78 = dma.done [#allocation9], 1024
    $region33: #{tpu_custom_call.1} parent=1 // pred_fallthru
      _
    %v79 = vld [vmem:[#allocation2] sm:$0xff]
    %v80 = vld [vmem:[#allocation2 + $0x8] sm:$0xff]
    %v81 = vld [vmem:[#allocation5 + $0x1] ss:$0 sm:$0xff]
    %v82 = vld [vmem:[#allocation5 + $0x2] ss:$0 sm:$0xff]
    %83 = vadd.xlane.f32.xlu0 %v79
    %v84 = vpop.xlane.xlu0 %83
    %85 = vadd.xlane.f32.xlu0 %v80
    %v86 = vpop.xlane.xlu0 %85
    %v87 = vmul.f32 %v79, %v79
    %v88 = vmul.f32 %v80, %v80
    %89 = vadd.xlane.f32.xlu0 %v87
    %v90 = vpop.xlane.xlu0 %89
    %91 = vadd.xlane.f32.xlu0 %v88
    %v92 = vpop.xlane.xlu0 %91
    %v93 = vmul.f32 %v84, 0.03125
    %v94 = vmul.f32 %v86, 0.03125
    %v95 = vmul.f32 %v90, 0.03125
    %v96 = vmul.f32 %v92, 0.03125
    %v97 = vmul.f32 %v93, %v93
    %v98 = vmul.f32 %v94, %v94
    %v99 = vsub.f32 %v95, %v97
    %v100 = vsub.f32 %v96, %v98
    %v101 = vmax.f32 %v99, 0.0
    %v102 = vmax.f32 %v100, 0.0
    %v103 = vsub.f32 %v79, %v93
    %v104 = vsub.f32 %v80, %v94
    %v105 = vadd.f32 %v101, 1e-05
    %v106 = vadd.f32 %v102, 1e-05
    %v107 = vrsqrt.pop %v105
    %v108 = vmul.f32 %v107, %v105
    %v109 = vmul.f32 %v108, %v107
    %v110 = vmul.f32 0.5, %v109
    %v111 = vsub.f32 1.5, %v110
    %v112 = vmul.f32 %v107, %v111
    %vm113 = vweird.f32 %v105
    %vm114 = vweird.f32 %v107
    %vm115 = vmor %vm113, %vm114
    %v116 = vsel %vm115, %v107, %v112
    %v117 = vrsqrt.pop %v106
    %v118 = vmul.f32 %v117, %v106
    %v119 = vmul.f32 %v118, %v117
    %v120 = vmul.f32 0.5, %v119
    %v121 = vsub.f32 1.5, %v120
    %v122 = vmul.f32 %v117, %v121
    %vm123 = vweird.f32 %v106
    %vm124 = vweird.f32 %v117
    %vm125 = vmor %vm123, %vm124
    %v126 = vsel %vm125, %v117, %v122
    %v127 = vmul.f32 %v103, %v116
    %v128 = vmul.f32 %v104, %v126
    %v129 = vmul.f32 %v127, %v81
    %v130 = vmul.f32 %v128, %v81
    %v131 = vadd.f32 %v129, %v82
    %v132 = vadd.f32 %v130, %v82
    %v133 = vpack.c.bf16 %v132, %v131
    %v134 = vld [vmem:[#allocation7] sm:$0xff]
    %v135 = vld [vmem:[#allocation7 + $0x8] sm:$0xff]
    %v136 = vld [vmem:[#allocation7 + $0x10] sm:$0xff]
    %v137 = vld [vmem:[#allocation7 + $0x18] sm:$0xff]
    %v138 = vld [vmem:[#allocation7 + $0x20] sm:$0xff]
    %v139 = vld [vmem:[#allocation7 + $0x28] sm:$0xff]
    %v140 = vld [vmem:[#allocation7 + $0x30] sm:$0xff]
    %v141 = vld [vmem:[#allocation7 + $0x38] sm:$0xff]
    %v142 = vld [vmem:[#allocation7 + $0x40] sm:$0xff]
    %v143 = vld [vmem:[#allocation7 + $0x48] sm:$0xff]
    %v144 = vld [vmem:[#allocation7 + $0x50] sm:$0xff]
    %v145 = vld [vmem:[#allocation7 + $0x58] sm:$0xff]
    %v146 = vld [vmem:[#allocation7 + $0x60] sm:$0xff]
    %v147 = vld [vmem:[#allocation7 + $0x68] sm:$0xff]
    %v148 = vld [vmem:[#allocation7 + $0x70] sm:$0xff]
    %v149 = vld [vmem:[#allocation7 + $0x78] sm:$0xff]
    %v150 = vld [vmem:[#allocation5] ss:$8 sm:$0x3]
    %v152 = vperm.slane %v150, 0
    %v153 = vperm.slane %v150, 1
    %v172 = vunpack.c.l.b16 %v134
    %v173 = vunpack.c.h.b16 %v134
    %v174 = vunpack.c.l.b16 %v135
    %v175 = vunpack.c.h.b16 %v135
    %v176 = vunpack.c.l.b16 %v136
    %v177 = vunpack.c.h.b16 %v136
    %v178 = vunpack.c.l.b16 %v137
    %v179 = vunpack.c.h.b16 %v137
    %v180 = vunpack.c.l.b16 %v138
    %v181 = vunpack.c.h.b16 %v138
    %v182 = vunpack.c.l.b16 %v139
    %v183 = vunpack.c.h.b16 %v139
    %v184 = vunpack.c.l.b16 %v140
    %v185 = vunpack.c.h.b16 %v140
    %v186 = vunpack.c.l.b16 %v141
    %v187 = vunpack.c.h.b16 %v141
    %v188 = vunpack.c.l.b16 %v142
    %v189 = vunpack.c.h.b16 %v142
    %v190 = vunpack.c.l.b16 %v143
    %v191 = vunpack.c.h.b16 %v143
    %v192 = vunpack.c.l.b16 %v144
    %v193 = vunpack.c.h.b16 %v144
    %v194 = vunpack.c.l.b16 %v145
    %v195 = vunpack.c.h.b16 %v145
    %v196 = vunpack.c.l.b16 %v146
    %v197 = vunpack.c.h.b16 %v146
    %v198 = vunpack.c.l.b16 %v147
    %v199 = vunpack.c.h.b16 %v147
    %v200 = vunpack.c.l.b16 %v148
    %v201 = vunpack.c.h.b16 %v148
    %v202 = vunpack.c.l.b16 %v149
    %v203 = vunpack.c.h.b16 %v149
    %v204 = vpack.c.b16 %v174, %v172
    %v205 = vpack.c.b16 %v175, %v173
    %v206 = vpack.c.b16 %v178, %v176
    %v207 = vpack.c.b16 %v179, %v177
    %v208 = vpack.c.b16 %v182, %v180
    %v209 = vpack.c.b16 %v183, %v181
    %v210 = vpack.c.b16 %v186, %v184
    %v211 = vpack.c.b16 %v187, %v185
    %v212 = vpack.c.b16 %v190, %v188
    %v213 = vpack.c.b16 %v191, %v189
    %v214 = vpack.c.b16 %v194, %v192
    %v215 = vpack.c.b16 %v195, %v193
    %v216 = vpack.c.b16 %v198, %v196
    %v217 = vpack.c.b16 %v199, %v197
    %v218 = vpack.c.b16 %v202, %v200
    %v219 = vpack.c.b16 %v203, %v201
    %236 = vmatpush.bf16.msra.mxu0 %v218
    %237 = vmatpush.bf16.msra.mxu0 %v216
    %238 = vmatpush.bf16.msra.mxu0 %v214
    %239 = vmatpush.bf16.msra.mxu0 %v212
    %240 = vmatpush.bf16.msra.mxu0 %v210
    %241 = vmatpush.bf16.msra.mxu0 %v208
    %242 = vmatpush.bf16.msra.mxu0 %v206
    %243 = vmatpush.bf16.msra.mxu0 %v204
    %244 = vmatmul.bf16.gmra.mxu0 %v133
    %v245 = vpop.f32.mrf.mxu0
    %v246 = vadd.f32 %v152, %v245
    %v247 = vpop.f32.mrf.mxu0
    %v248 = vadd.f32 %v152, %v247
    %249 = vdwg.mxu0
    %250 = vmatpush.bf16.msra.mxu0 %v219
    %251 = vmatpush.bf16.msra.mxu0 %v217
    %252 = vmatpush.bf16.msra.mxu0 %v215
    %253 = vmatpush.bf16.msra.mxu0 %v213
    %254 = vmatpush.bf16.msra.mxu0 %v211
    %255 = vmatpush.bf16.msra.mxu0 %v209
    %256 = vmatpush.bf16.msra.mxu0 %v207
    %257 = vmatpush.bf16.msra.mxu0 %v205
    %258 = vmatmul.bf16.gmra.mxu0 %v133
    %v259 = vpop.f32.mrf.mxu0
    %v260 = vadd.f32 %v153, %v259
    %v261 = vpop.f32.mrf.mxu0
    %v262 = vadd.f32 %v153, %v261
    %263 = vdwg.mxu0
    %v264 = vmul.f32 %v246, 0.5
    %v265 = vmul.f32 %v248, 0.5
    %v266 = vmul.f32 %v246, 0.70710677
    %v267 = vmul.f32 %v248, 0.70710677
    %v268 = vmul.f32 %v266, %v266
    %v269 = vmin.f32 16.0, %v268
    %v270 = vmul.f32 %v269, 2.1237322e-06
    %v271 = vadd.f32 %v270, 0.00028619796
    %v272 = vmul.f32 %v269, %v271
    %v273 = vadd.f32 %v272, 0.0036580483
    %v274 = vmul.f32 %v269, %v273
    %v275 = vadd.f32 %v274, 0.05243302
    %v276 = vmul.f32 %v269, %v275
    %v277 = vadd.f32 %v276, 0.18741608
    %v278 = vmul.f32 %v269, %v277
    %v279 = vadd.f32 %v278, 1.1283791
    %v280 = vmul.f32 %v266, %v279
    %v281 = vmul.f32 %v269, 3.8918573e-05
    %v282 = vadd.f32 %v281, 0.001143296
    %v283 = vmul.f32 %v269, %v282
    %v284 = vadd.f32 %v283, 0.014752088
    %v285 = vmul.f32 %v269, %v284
    %v286 = vadd.f32 %v285, 0.112945676
    %v287 = vmul.f32 %v269, %v286
    %v288 = vadd.f32 %v287, 0.4994258
    %v289 = vmul.f32 %v269, %v288
    %v290 = vadd.f32 %v289, 1.0
    %v291 = vrcp.pop %v290
    %v292 = vmul.f32 %v290, %v291
    %v293 = vsub.f32 1.0, %v292
    %v294 = vmul.f32 %v291, %v293
    %v295 = vadd.f32 %v291, %v294
    %vm296 = vweird.f32 %v290
    %vm297 = vweird.f32 %v291
    %vm298 = vmor %vm296, %vm297
    %v299 = vsel %vm298, %v291, %v295
    %v300 = vand.u32 2147483647, %v290
    %vm301 = vcmp.eq.f32.partialorder %v300, 8.507059e+37
    %v302 = vand.u32 %v290, 2147483648
    %v303 = vor.u32 1.1754944e-38, %v302
    %v304 = vsel %vm301, %v303, %v299
    %v305 = vmul.f32 %v280, %v304
    %v306 = vmin.f32 %v305, 1.0
    %v307 = vmax.f32 %v306, -1.0
    %v308 = vmul.f32 %v267, %v267
    %v309 = vmin.f32 16.0, %v308
    %v310 = vmul.f32 %v309, 2.1237322e-06
    %v311 = vadd.f32 %v310, 0.00028619796
    %v312 = vmul.f32 %v309, %v311
    %v313 = vadd.f32 %v312, 0.0036580483
    %v314 = vmul.f32 %v309, %v313
    %v315 = vadd.f32 %v314, 0.05243302
    %v316 = vmul.f32 %v309, %v315
    %v317 = vadd.f32 %v316, 0.18741608
    %v318 = vmul.f32 %v309, %v317
    %v319 = vadd.f32 %v318, 1.1283791
    %v320 = vmul.f32 %v267, %v319
    %v321 = vmul.f32 %v309, 3.8918573e-05
    %v322 = vadd.f32 %v321, 0.001143296
    %v323 = vmul.f32 %v309, %v322
    %v324 = vadd.f32 %v323, 0.014752088
    %v325 = vmul.f32 %v309, %v324
    %v326 = vadd.f32 %v325, 0.112945676
    %v327 = vmul.f32 %v309, %v326
    %v328 = vadd.f32 %v327, 0.4994258
    %v329 = vmul.f32 %v309, %v328
    %v330 = vadd.f32 %v329, 1.0
    %v331 = vrcp.pop %v330
    %v332 = vmul.f32 %v330, %v331
    %v333 = vsub.f32 1.0, %v332
    %v334 = vmul.f32 %v331, %v333
    %v335 = vadd.f32 %v331, %v334
    %vm336 = vweird.f32 %v330
    %vm337 = vweird.f32 %v331
    %vm338 = vmor %vm336, %vm337
    %v339 = vsel %vm338, %v331, %v335
    %v340 = vand.u32 2147483647, %v330
    %vm341 = vcmp.eq.f32.partialorder %v340, 8.507059e+37
    %v342 = vand.u32 %v330, 2147483648
    %v343 = vor.u32 1.1754944e-38, %v342
    %v344 = vsel %vm341, %v343, %v339
    %v345 = vmul.f32 %v320, %v344
    %v346 = vmin.f32 %v345, 1.0
    %v347 = vmax.f32 %v346, -1.0
    %v348 = vadd.f32 %v307, 1.0
    %v349 = vadd.f32 %v347, 1.0
    %v350 = vmul.f32 %v264, %v348
    %v351 = vmul.f32 %v265, %v349
    %v352 = vmul.f32 %v350, %v260
    %v353 = vmul.f32 %v351, %v262
    %v354 = vpack.c.bf16 %v353, %v352
    %v355 = vld [vmem:[#allocation8] sm:$0xf]
    %v356 = vld [vmem:[#allocation8 + $0x4] sm:$0xf]
    %v357 = vld [vmem:[#allocation8 + $0x8] sm:$0xf]
    %v358 = vld [vmem:[#allocation8 + $0xc] sm:$0xf]
    %v359 = vld [vmem:[#allocation8 + $0x10] sm:$0xf]
    %v360 = vld [vmem:[#allocation8 + $0x14] sm:$0xf]
    %v361 = vld [vmem:[#allocation8 + $0x18] sm:$0xf]
    %v362 = vld [vmem:[#allocation8 + $0x1c] sm:$0xf]
    %v363 = vld [vmem:[#allocation8 + $0x20] sm:$0xf]
    %v364 = vld [vmem:[#allocation8 + $0x24] sm:$0xf]
    %v365 = vld [vmem:[#allocation8 + $0x28] sm:$0xf]
    %v366 = vld [vmem:[#allocation8 + $0x2c] sm:$0xf]
    %v367 = vld [vmem:[#allocation8 + $0x30] sm:$0xf]
    %v368 = vld [vmem:[#allocation8 + $0x34] sm:$0xf]
    %v369 = vld [vmem:[#allocation8 + $0x38] sm:$0xf]
    %v370 = vld [vmem:[#allocation8 + $0x3c] sm:$0xf]
    %v371 = vld [vmem:[#allocation5 + $0x3] ss:$0 sm:$0xff]
    %v388 = vunpack.c.l.b16 %v355
    %v389 = vunpack.c.l.b16 %v356
    %v390 = vunpack.c.l.b16 %v357
    %v391 = vunpack.c.l.b16 %v358
    %v392 = vunpack.c.l.b16 %v359
    %v393 = vunpack.c.l.b16 %v360
    %v394 = vunpack.c.l.b16 %v361
    %v395 = vunpack.c.l.b16 %v362
    %v396 = vunpack.c.l.b16 %v363
    %v397 = vunpack.c.l.b16 %v364
    %v398 = vunpack.c.l.b16 %v365
    %v399 = vunpack.c.l.b16 %v366
    %v400 = vunpack.c.l.b16 %v367
    %v401 = vunpack.c.l.b16 %v368
    %v402 = vunpack.c.l.b16 %v369
    %v403 = vunpack.c.l.b16 %v370
    %v404 = vpack.c.b16 %v389, %v388
    %v405 = vpack.c.b16 %v391, %v390
    %v406 = vpack.c.b16 %v393, %v392
    %v407 = vpack.c.b16 %v395, %v394
    %v408 = vpack.c.b16 %v397, %v396
    %v409 = vpack.c.b16 %v399, %v398
    %v410 = vpack.c.b16 %v401, %v400
    %v411 = vpack.c.b16 %v403, %v402
    %420 = vmatpush.bf16.msra.mxu0 %v411
    %421 = vmatpush.bf16.msra.mxu0 %v410
    %422 = vmatpush.bf16.msra.mxu0 %v409
    %423 = vmatpush.bf16.msra.mxu0 %v408
    %424 = vmatpush.bf16.msra.mxu0 %v407
    %425 = vmatpush.bf16.msra.mxu0 %v406
    %426 = vmatpush.bf16.msra.mxu0 %v405
    %427 = vmatpush.bf16.msra.mxu0 %v404
    %428 = vmatmul.bf16.gmra.mxu0 %v354
    %v429 = vpop.f32.mrf.mxu0
    %v430 = vadd.f32 %v371, %v429
    %v431 = vpop.f32.mrf.mxu0
    %v432 = vadd.f32 %v371, %v431
    %433 = vdwg.mxu0
    %v434 = vadd.f32 %v430, %v79
    %v435 = vadd.f32 %v432, %v80
    %436 = vst [vmem:[#allocation10] sm:$0xff] %v434
    %437 = vst [vmem:[#allocation10 + $0x8] sm:$0xff] %v435
    // Predicated region
    $region34: #{tpu_custom_call.1} parent=1 // pred_check
      _
    $region35: #{tpu_custom_call.1} parent=1 // pred_check_branch
      %439 = sbr.rel (0) target = $region37
    $region36: #{tpu_custom_call.1} parent=1 // pred_region
      %441 = vsyncadd [#allocation4], 0
      %s442 = sshll.u32 [#allocation10], 4
      %s443 = int_to_ptr.vmem [resolvable:$true] %s442
      %s444 = sshll.u32 %s4, 4
      %s445 = int_to_ptr.hbm [resolvable:$true] %s444
      %450 = dma.vmem_to_hbm [thread:$0]  %s443, 256, %s445, [#allocation4], 128, 128, 8
    $region37: #{tpu_custom_call.1} parent=1 // pred_fallthru
      _
    // Predicated region
    $region38: #{tpu_custom_call.1} parent=1 // pred_check
      _
    $region39: #{tpu_custom_call.1} parent=1 // pred_check_branch
      %452 = sbr.rel (0) target = $region41
    $region40: #{tpu_custom_call.1} parent=1 // pred_region
      %454 = dma.done [#allocation4], 256
    $region41: #{tpu_custom_call.1} parent=1 // pred_fallthru
      _
    %455 = vsyncpa [#allocation3], 1
    %456 = vsyncpa [#allocation6], 1
    %457 = vsyncpa [#allocation9], 1
    %458 = vsyncpa [#allocation4], 1

</llo_original>
